<compile_context>
chip_gen: v7x
topology: tpu7x:2x2x1
jax: 0.10.0
libtpu: 0.0.40
codegen_flags: <defaults>
</compile_context>

<pallas_src>
import numpy as np
import jax
import jax.numpy as jnp
from jax.experimental import pallas as pl
from jax.experimental.pallas import tpu as pltpu

INTERVAL_LENGTH = 8.0


def _pick_tile_n(N):
    """Row tile: prefer >= 8 grid steps (even count), tile_n <= 1024, divisor of N."""
    candidates = [t for t in (1024, 512, 256, 128, 64, 32, 16, 8) if N % t == 0]
    if not candidates:
        return N  # awkward/tiny N: single full-height block

    def score(t):
        steps = N // t
        return (steps >= 8, steps % 2 == 0, t)

    return max(candidates, key=score)


def _vmem_budget_bytes():
    """Per-generation VMEM budget: ~0.65x physical capacity (leave headroom for
    compiler-internal scratch). Falls back to v7x-sized 64 MiB if unqueryable."""
    cap = 64 * 1024 * 1024
    try:
        cap = int(pltpu.get_tpu_info().vmem_capacity_bytes)
    except Exception:
        pass
    return int(cap * 0.65)


def _pick_tile_j(J_pad, tile_n, budget_bytes):
    """Largest lane-dense J tile (multiple of 128, divisor of J_pad) whose
    double-buffered blocks fit the VMEM budget."""
    m = J_pad // 128
    best = 128
    for d in range(1, m + 1):
        if m % d:
            continue
        tj = 128 * d
        # double-buffered f32 blocks: out + x + blend + w + b
        need = 2 * 4 * (tile_n * tj + 2 * tile_n + 2 * tj)
        if need <= budget_bytes:
            best = tj
    return best


def make_rfm_rep_forward(in_features, J_n, x_max, x_min, N,
                         tile_n=None, out_dtype=jnp.float32):
    """Builds a Pallas forward for RFM_rep with static geometry/branch."""
    # The PoU blend broadcasts per-point masks against (N, J_n) features, which
    # (like the PyTorch module) is only well-defined for 1-D inputs.
    assert in_features == 1, "RFM_rep PoU blend is defined for in_features == 1"

    if tile_n is None:
        tile_n = _pick_tile_n(N)
    assert N % tile_n == 0

    J_pad = ((J_n + 127) // 128) * 128           # lane-dense output last dim
    budget = _vmem_budget_bytes()
    tile_j = _pick_tile_j(J_pad, tile_n, budget)
    assert J_pad % tile_j == 0

    a = np.float32(2.0 / (x_max - x_min))
    x0 = np.float32((x_max + x_min) / 2.0)
    xmin_f = np.float32(x_min)
    xmax_f = np.float32(x_max)
    two_pi = np.float32(2.0 * np.pi)

    # The if/elif/else on x_min / x_max is a compile-time (module-config) branch.
    if x_min == 0:
        branch = 0
    elif x_max == INTERVAL_LENGTH:
        branch = 1
    else:
        branch = 2

    def kernel(x_ref, blend_ref, w_ref, b_ref, o_ref):
        x = x_ref[...]                                    # (tile_n, 1) raw input
        # hidden_layer: Linear(1 -> J) + Tanh, with a/x0 folded into w'/b'.
        # Rank-1 -> VPU broadcast FMA; tanh is the only EUP op in the kernel.
        y = jnp.tanh(x * w_ref[...] + b_ref[...])         # (tile_n, tile_j)
        # Single full-width multiply by the precomputed (tile_n, 1) PoU factor.
        o_ref[...] = (y * blend_ref[...]).astype(o_ref.dtype)

    cost = pl.CostEstimate(
        flops=int(4 * N * J_pad),                   # FMA + blend epilogue
        transcendentals=int(N * J_pad),             # tanh (sin is wrapper-side)
        bytes_accessed=int(4 * (2 * N + 2 * J_pad)
                           + jnp.dtype(out_dtype).itemsize * N * J_pad),
    )

    def _blend_factor(x32):
        # Same arithmetic as the PyTorch forward (division, not reciprocal) so
        # mask boundaries at d in {0.25, 0.75, 1.25} cannot flip by 1 ulp.
        d = (x32 - xmin_f) / (xmax_f - xmin_f)            # (N, 1)
        s = jnp.sin(two_pi * d)
        d1 = ((d <= 0.25) & (d > -0.25)).astype(jnp.float32)
        d2 = ((d <= 0.75) & (d > 0.25)).astype(jnp.float32)
        d3 = ((d <= 1.25) & (d > 0.75)).astype(jnp.float32)
        if branch == 0:       # x_min == 0
            return (d1 + d2) + d3 * (1.0 - s) * 0.5
        elif branch == 1:     # x_max == interval_length
            return d1 * (1.0 + s) * 0.5 + (d2 + d3)
        else:                 # interior partition
            return d1 * (1.0 + s) * 0.5 + d2 + d3 * (1.0 - s) * 0.5

    def forward(x, W, b):
        # W: (J_n, in_features=1), b: (J_n,) -- same as torch.nn.Linear params.
        W32 = jnp.asarray(W, jnp.float32).reshape(J_n)
        b32 = jnp.asarray(b, jnp.float32).reshape(J_n)
        # Fold the affine input map into the Linear:
        #   tanh(a*(x-x0)*W + b) == tanh(x*(a*W) + (b - a*x0*W))
        w_row = (a * W32).reshape(1, J_n)
        b_row = (b32 - (a * x0) * W32).reshape(1, J_n)
        if J_pad != J_n:                                  # keep stores lane-dense
            pad = J_pad - J_n
            w_row = jnp.pad(w_row, ((0, 0), (0, pad)))
            b_row = jnp.pad(b_row, ((0, 0), (0, pad)))

        x32 = jnp.asarray(x, jnp.float32)                 # (N, 1)
        blend = _blend_factor(x32)                        # (N, 1)

        out = pl.pallas_call(
            kernel,
            out_shape=jax.ShapeDtypeStruct((N, J_pad), out_dtype),
            grid_spec=pltpu.PrefetchScalarGridSpec(
                num_scalar_prefetch=0,
                grid=(N // tile_n, J_pad // tile_j),
                in_specs=[
                    pl.BlockSpec((tile_n, in_features), lambda i, j: (i, 0)),
                    pl.BlockSpec((tile_n, 1), lambda i, j: (i, 0)),
                    pl.BlockSpec((1, tile_j), lambda i, j: (0, j)),
                    pl.BlockSpec((1, tile_j), lambda i, j: (0, j)),
                ],
                out_specs=pl.BlockSpec((tile_n, tile_j), lambda i, j: (i, j)),
            ),
            compiler_params=pltpu.CompilerParams(
                dimension_semantics=("parallel", "parallel"),
                vmem_limit_bytes=budget,
            ),
            cost_estimate=cost,
        )(x32, blend, w_row, b_row)

        if J_pad != J_n:
            out = out[:, :J_n]
        return out

    return forward


def rfm_rep_reference(x, W, b, x_max, x_min):
    """Plain-JAX reference mirroring the PyTorch forward (for verification)."""
    a = 2.0 / (x_max - x_min)
    x0 = (x_max + x_min) / 2.0
    d = (x - x_min) / (x_max - x_min)
    y = jnp.tanh((a * (x - x0)) @ W.T + b)
    s = jnp.sin(2 * np.pi * d)
    d1 = ((d <= 0.25) & (d > -0.25)).astype(jnp.float32)
    d2 = ((d <= 0.75) & (d > 0.25)).astype(jnp.float32)
    d3 = ((d <= 1.25) & (d > 0.75)).astype(jnp.float32)
    y1 = y * (1 + s) / 2
    y2 = y
    y3 = y * (1 - s) / 2
    if x_min == 0:
        return (d1 + d2) * y2 + d3 * y3
    elif x_max == INTERVAL_LENGTH:
        return d1 * y1 + (d2 + d3) * y2
    else:
        return d1 * y1 + d2 * y2 + d3 * y3


if __name__ == "__main__":
    in_features = 1
    N = 256

    key = jax.random.PRNGKey(0)
    kx, kw, kb = jax.random.split(key, 3)

    # Exercise all three compile-time PoU branches plus the J_n-padding path.
    configs = [
        (0.0, 2.0, 128),               # x_min == 0             -> branch 0
        (6.0, INTERVAL_LENGTH, 128),   # x_max == interval_len  -> branch 1
        (2.0, 4.0, 128),               # interior partition     -> branch 2
        (2.0, 4.0, 96),                # non-multiple-of-128 J_n -> padded store
    ]
    for x_min, x_max, J_n in configs:
        # Deterministic Linear init (uniform +-1/sqrt(in), like torch.nn.Linear).
        bound = 1.0 / np.sqrt(in_features)
        W = jax.random.uniform(kw, (J_n, in_features), jnp.float32, -bound, bound)
        b = jax.random.uniform(kb, (J_n,), jnp.float32, -bound, bound)

        # Sample points spanning a bit beyond [x_min, x_max] to hit all masks.
        x = jax.random.uniform(kx, (N, in_features), jnp.float32,
                               minval=x_min - 1.0, maxval=x_max + 1.0)

        forward = make_rfm_rep_forward(in_features, J_n, x_max, x_min, N)
        out = jax.block_until_ready(forward(x, W, b))

        ref = rfm_rep_reference(x, W, b, x_max, x_min)
        np.testing.assert_allclose(np.asarray(out), np.asarray(ref),
                                   rtol=1e-5, atol=1e-5)

    print("KERNEL_OK")
</pallas_src>

<mosaic_0001>
module attributes {stable_mosaic.version = 11 : i64} {
  func.func @kernel(%arg0: i32, %arg1: i32, %arg2: memref<32x1xf32, #tpu.memory_space<vmem>>, %arg3: memref<32x1xf32, #tpu.memory_space<vmem>>, %arg4: memref<1x128xf32, #tpu.memory_space<vmem>>, %arg5: memref<1x128xf32, #tpu.memory_space<vmem>>, %arg6: memref<32x128xf32, #tpu.memory_space<vmem>>) attributes {dimension_semantics = [#tpu.dimension_semantics<parallel>, #tpu.dimension_semantics<parallel>], iteration_bounds = array<i64: 8, 1>, scalar_prefetch = 0 : i64, scratch_operands = 0 : i64, tpu.core_type = #tpu.core_type<tc>, window_params = [{transform_indices = @transform_0, window_bounds = array<i64: 32, 1>}, {transform_indices = @transform_1, window_bounds = array<i64: 32, 1>}, {transform_indices = @transform_2, window_bounds = array<i64: 1, 128>}, {transform_indices = @transform_3, window_bounds = array<i64: 1, 128>}, {transform_indices = @transform_4, window_bounds = array<i64: 32, 128>}]} {
    %c0 = arith.constant 0 : index
    %c0_0 = arith.constant 0 : index
    %0 = vector.load %arg2[%c0, %c0_0] : memref<32x1xf32, #tpu.memory_space<vmem>>, vector<32x1xf32>
    %c0_1 = arith.constant 0 : index
    %c0_2 = arith.constant 0 : index
    %1 = vector.load %arg4[%c0_1, %c0_2] : memref<1x128xf32, #tpu.memory_space<vmem>>, vector<1x128xf32>
    %2 = vector.broadcast %0 : vector<32x1xf32> to vector<32x128xf32>
    %3 = vector.broadcast %1 : vector<1x128xf32> to vector<32x128xf32>
    %4 = arith.mulf %2, %3 : vector<32x128xf32>
    %c0_3 = arith.constant 0 : index
    %c0_4 = arith.constant 0 : index
    %5 = vector.load %arg5[%c0_3, %c0_4] : memref<1x128xf32, #tpu.memory_space<vmem>>, vector<1x128xf32>
    %6 = vector.broadcast %5 : vector<1x128xf32> to vector<32x128xf32>
    %7 = arith.addf %4, %6 : vector<32x128xf32>
    %8 = math.tanh %7 : vector<32x128xf32>
    %c0_5 = arith.constant 0 : index
    %c0_6 = arith.constant 0 : index
    %9 = vector.load %arg3[%c0_5, %c0_6] : memref<32x1xf32, #tpu.memory_space<vmem>>, vector<32x1xf32>
    %10 = vector.broadcast %9 : vector<32x1xf32> to vector<32x128xf32>
    %11 = arith.mulf %8, %10 : vector<32x128xf32>
    %c0_7 = arith.constant 0 : index
    %c0_8 = arith.constant 0 : index
    %12 = vector.load %arg6[%c0_7, %c0_8] : memref<32x128xf32, #tpu.memory_space<vmem>>, vector<32x128xf32>
    tpu.vector_store %arg6[%c0_7, %c0_8], %11 {strides = array<i32>} : memref<32x128xf32, #tpu.memory_space<vmem>>, vector<32x128xf32>,
    return
  }
  func.func @transform_0(%arg0: i32, %arg1: i32) -> (i32, i32) {
    %c0_i32 = arith.constant 0 : i32
    %c0_i32_0 = arith.constant 0 : i32
    return %arg0, %c0_i32 : i32, i32
  }
  func.func @transform_1(%arg0: i32, %arg1: i32) -> (i32, i32) {
    %c0_i32 = arith.constant 0 : i32
    %c0_i32_0 = arith.constant 0 : i32
    return %arg0, %c0_i32 : i32, i32
  }
  func.func @transform_2(%arg0: i32, %arg1: i32) -> (i32, i32) {
    %c0_i32 = arith.constant 0 : i32
    %c0_i32_0 = arith.constant 0 : i32
    return %c0_i32, %arg1 : i32, i32
  }
  func.func @transform_3(%arg0: i32, %arg1: i32) -> (i32, i32) {
    %c0_i32 = arith.constant 0 : i32
    %c0_i32_0 = arith.constant 0 : i32
    return %c0_i32, %arg1 : i32, i32
  }
  func.func @transform_4(%arg0: i32, %arg1: i32) -> (i32, i32) {
    %c0_i32 = arith.constant 0 : i32
    return %arg0, %arg1 : i32, i32
  }
}

</mosaic_0001>

<llo_original>
// kernel: tpu_custom_call.1
$region0: #{tpu_custom_call.1}
  #allocation0 [shape = 'u32[]', space=smem, size = 0x4, offset = 0x4, fixed_abs, tag = 'smem constant byte address 0x4 - core index']
  #allocation1 [shape = 'u32[144,128]{1,0:T(1,128)}', space=vmem, size = 0x12000, scoped, tag = 'internal scratch']
  %s0 = inlined_call_operand.vmem [shape: f32[256,1], index: 0, kind: input, shape index: {}]
  %s1 = inlined_call_operand.vmem [shape: f32[256,1], index: 1, kind: input, shape index: {}]
  %s2 = inlined_call_operand.vmem [shape: f32[1,128], index: 2, kind: input, shape index: {}]
  %s3 = inlined_call_operand.vmem [shape: f32[1,128], index: 3, kind: input, shape index: {}]
  %s4 = inlined_call_operand.hbm [shape: f32[256,128], index: 4, kind: output, shape index: {}]
  %s5 = sld [smem:[#allocation0]]
  $region49: #{tpu_custom_call.1} parent=0
    _
  %s7 = ssub.s32 1, %s5
  %s8 = scalar_select 0, %s7, %s5
  $region1: #{tpu_custom_call.1} parent=0
    #allocation2 [shape = 'u8[32768]{0}', space=vmem, size = 0x8000, scoped, tag = 'output window, operand 0']
    #allocation3 [shape = 's32[2]{0}', space=sflag, size = 0x8, scoped, tag = 'scoped memory for tpu_custom_call.1']
    %9 = vsyncpa [#allocation3], 0
    %s10 = scalar_lea.sflag [#allocation3], 1
    %11 = vsyncpa %s10, 0
    loop: start=0, step=1, limit=10
    $region2: #{tpu_custom_call.1} parent=1 // loop_pre_header
      _
    $region3: #{tpu_custom_call.1} parent=1 // loop_header
      %s13 = sphi 0, %s17
      %p14 = scmp.ge.s32.totalorder %s13, 10
      %s20 = sphi 0, %s32
      %s21 = sphi 0, %s28
      %s22 = sphi 0, %s20
      %s23 = sphi 0, %s21
      %s24 = sphi 0, %s22
      %s25 = sphi 0, %s23
      %s35 = sphi 0, %s37
      %s38 = sphi 0, %s35
      %s39 = sphi 0, %s38
      %s55 = sphi 0, %s39
      %s61 = sphi 0, %s63
      %s64 = sphi 0, %s61
      %s65 = sphi 0, %s64
      %s81 = sphi 0, %s65
      %s87 = sphi 0, %s89
      %s90 = sphi 0, %s87
      %s91 = sphi 0, %s90
      %s107 = sphi 0, %s91
      %s113 = sphi 0, %s115
      %s116 = sphi 0, %s113
      %s117 = sphi 0, %s116
      %s133 = sphi 0, %s117
      %s141 = sphi 0, %s143
      %s144 = sphi 0, %s141
      %s145 = sphi 0, %s144
      %s161 = sphi 0, %s145
    $region4: #{tpu_custom_call.1} parent=1 // loop_header_branch
      %16 = sbr.rel (%p14) target = $region8
    $region5: #{tpu_custom_call.1} parent=1 // loop_body
      %s18 = ssub.s32 %s13, 1
      %s19 = ssub.s32 %s13, 2
      %s26 = sadd.s32 1, %s21
      %p27 = scmp.ge.s32.totalorder %s26, 1
      %s28 = scalar_select %p27, 0, %s26
      %s29 = sadd.s32 1, %s20
      %s30 = scalar_select %p27, %s29, %s20
      %p31 = scmp.ge.s32.totalorder %s30, 8
      %s32 = scalar_select %p31, 0, %s30
      %s33 = ssub.s32 %s20, %s32
      %p34 = scmp.eq.s32.totalorder %s33, 0
      %s36 = sadd.s32 %s35, 1
      %s37 = scalar_select %p34, %s35, %s36
      %p40 = pneg %p34
      %p41 = scmp.eq.s32.totalorder %s13, 7
      %p42 = por %p40, %p41
      %p43 = scmp.ne.s32.totalorder %s35, %s38
      %p44 = scmp.eq.s32.totalorder %s13, 0
      %p45 = por %p43, %p44
      %p46 = scmp.ne.s32.totalorder %s35, %s38
      %p47 = scmp.eq.s32.totalorder %s18, 7
      %p48 = por %p46, %p47
      %p49 = scmp.ne.s32.totalorder %s38, %s39
      %p50 = scmp.eq.s32.totalorder %s18, 0
      %p51 = por %p49, %p50
      %p52 = scmp.ne.s32.totalorder %s38, %s39
      %p53 = scmp.eq.s32.totalorder %s19, 7
      %p54 = por %p52, %p53
      %p56 = scmp.ne.s32.totalorder %s39, %s55
      %p57 = scmp.eq.s32.totalorder %s19, 0
      %p58 = por %p56, %p57
      %s59 = ssub.s32 %s20, %s32
      %p60 = scmp.eq.s32.totalorder %s59, 0
      %s62 = sadd.s32 %s61, 1
      %s63 = scalar_select %p60, %s61, %s62
      %p66 = pneg %p60
      %p67 = scmp.eq.s32.totalorder %s13, 7
      %p68 = por %p66, %p67
      %p69 = scmp.ne.s32.totalorder %s61, %s64
      %p70 = scmp.eq.s32.totalorder %s13, 0
      %p71 = por %p69, %p70
      %p72 = scmp.ne.s32.totalorder %s61, %s64
      %p73 = scmp.eq.s32.totalorder %s18, 7
      %p74 = por %p72, %p73
      %p75 = scmp.ne.s32.totalorder %s64, %s65
      %p76 = scmp.eq.s32.totalorder %s18, 0
      %p77 = por %p75, %p76
      %p78 = scmp.ne.s32.totalorder %s64, %s65
      %p79 = scmp.eq.s32.totalorder %s19, 7
      %p80 = por %p78, %p79
      %p82 = scmp.ne.s32.totalorder %s65, %s81
      %p83 = scmp.eq.s32.totalorder %s19, 0
      %p84 = por %p82, %p83
      %s85 = ssub.s32 %s21, %s28
      %p86 = scmp.eq.s32.totalorder %s85, 0
      %s88 = sadd.s32 %s87, 1
      %s89 = scalar_select %p86, %s87, %s88
      %p92 = pneg %p86
      %p93 = scmp.eq.s32.totalorder %s13, 7
      %p94 = por %p92, %p93
      %p95 = scmp.ne.s32.totalorder %s87, %s90
      %p96 = scmp.eq.s32.totalorder %s13, 0
      %p97 = por %p95, %p96
      %p98 = scmp.ne.s32.totalorder %s87, %s90
      %p99 = scmp.eq.s32.totalorder %s18, 7
      %p100 = por %p98, %p99
      %p101 = scmp.ne.s32.totalorder %s90, %s91
      %p102 = scmp.eq.s32.totalorder %s18, 0
      %p103 = por %p101, %p102
      %p104 = scmp.ne.s32.totalorder %s90, %s91
      %p105 = scmp.eq.s32.totalorder %s19, 7
      %p106 = por %p104, %p105
      %p108 = scmp.ne.s32.totalorder %s91, %s107
      %p109 = scmp.eq.s32.totalorder %s19, 0
      %p110 = por %p108, %p109
      %s111 = ssub.s32 %s21, %s28
      %p112 = scmp.eq.s32.totalorder %s111, 0
      %s114 = sadd.s32 %s113, 1
      %s115 = scalar_select %p112, %s113, %s114
      %p118 = pneg %p112
      %p119 = scmp.eq.s32.totalorder %s13, 7
      %p120 = por %p118, %p119
      %p121 = scmp.ne.s32.totalorder %s113, %s116
      %p122 = scmp.eq.s32.totalorder %s13, 0
      %p123 = por %p121, %p122
      %p124 = scmp.ne.s32.totalorder %s113, %s116
      %p125 = scmp.eq.s32.totalorder %s18, 7
      %p126 = por %p124, %p125
      %p127 = scmp.ne.s32.totalorder %s116, %s117
      %p128 = scmp.eq.s32.totalorder %s18, 0
      %p129 = por %p127, %p128
      %p130 = scmp.ne.s32.totalorder %s116, %s117
      %p131 = scmp.eq.s32.totalorder %s19, 7
      %p132 = por %p130, %p131
      %p134 = scmp.ne.s32.totalorder %s117, %s133
      %p135 = scmp.eq.s32.totalorder %s19, 0
      %p136 = por %p134, %p135
      %s137 = ssub.s32 %s20, %s32
      %s138 = ssub.s32 %s21, %s28
      %s139 = sor.u32 %s137, %s138
      %p140 = scmp.eq.s32.totalorder %s139, 0
      %s142 = sadd.s32 %s141, 1
      %s143 = scalar_select %p140, %s141, %s142
      %p146 = pneg %p140
      %p147 = scmp.eq.s32.totalorder %s13, 7
      %p148 = por %p146, %p147
      %p149 = scmp.ne.s32.totalorder %s141, %s144
      %p150 = scmp.eq.s32.totalorder %s13, 0
      %p151 = por %p149, %p150
      %p152 = scmp.ne.s32.totalorder %s141, %s144
      %p153 = scmp.eq.s32.totalorder %s18, 7
      %p154 = por %p152, %p153
      %p155 = scmp.ne.s32.totalorder %s144, %s145
      %p156 = scmp.eq.s32.totalorder %s18, 0
      %p157 = por %p155, %p156
      %p158 = scmp.ne.s32.totalorder %s144, %s145
      %p159 = scmp.eq.s32.totalorder %s19, 7
      %p160 = por %p158, %p159
      %p162 = scmp.ne.s32.totalorder %s145, %s161
      %p163 = scmp.eq.s32.totalorder %s19, 0
      %p164 = por %p162, %p163
      %p165 = scmp.le.s32.totalorder 1, %s13
      %p166 = scmp.lt.s32.totalorder %s13, 9
      %p167 = pnand %p165, %p166
      %p168 = pneg %p167
      // Predicated region
      $region9: #{tpu_custom_call.1} parent=5 // pred_check
        _
      $region10: #{tpu_custom_call.1} parent=5 // pred_check_branch
        %170 = sbr.rel (%p167) target = $region12
      $region11: #{tpu_custom_call.1} parent=5 // pred_region
        %s171 = ssub.s32 %s13, 1
        // Predicated region
        $region13: #{tpu_custom_call.1} parent=11 // pred_check
          %p172 = pneg %p103
        $region14: #{tpu_custom_call.1} parent=11 // pred_check_branch
          %174 = sbr.rel (%p172) target = $region16
        $region15: #{tpu_custom_call.1} parent=11 // pred_region
          %p175 = scmp.lt.s32.totalorder %s23, 0
          %s176 = scalar_select %p175, %s23, 0
          %s177 = scalar_lea.vmem %s2, %s176
        $region16: #{tpu_custom_call.1} parent=11 // pred_fallthru
          _
        // Predicated region
        $region17: #{tpu_custom_call.1} parent=11 // pred_check
          %p178 = pneg %p129
        $region18: #{tpu_custom_call.1} parent=11 // pred_check_branch
          %180 = sbr.rel (%p178) target = $region20
        $region19: #{tpu_custom_call.1} parent=11 // pred_region
          %p181 = scmp.lt.s32.totalorder %s23, 0
          %s182 = scalar_select %p181, %s23, 0
          %s183 = scalar_lea.vmem %s3, %s182
        $region20: #{tpu_custom_call.1} parent=11 // pred_fallthru
          _
      $region12: #{tpu_custom_call.1} parent=5 // pred_fallthru
        _
      %p184 = scmp.lt.s32.totalorder %s13, 8
      // Predicated region
      $region21: #{tpu_custom_call.1} parent=5 // pred_check
        %p185 = pneg %p184
      $region22: #{tpu_custom_call.1} parent=5 // pred_check_branch
        %187 = sbr.rel (%p185) target = $region24
      $region23: #{tpu_custom_call.1} parent=5 // pred_region
        // Predicated region
        $region25: #{tpu_custom_call.1} parent=23 // pred_check
          %p188 = pneg %p45
        $region26: #{tpu_custom_call.1} parent=23 // pred_check_branch
          %190 = sbr.rel (%p188) target = $region28
        $region27: #{tpu_custom_call.1} parent=23 // pred_region
          %s191 = smul.u32 4, %s20
          %p192 = scmp.lt.s32.totalorder %s191, 31
          %s193 = scalar_select %p192, %s191, 31
          %s194 = smul.addr %s193, 8
          %s195 = scalar_lea.vmem %s0, %s194
          %s196 = smul.u32 4, %s20
        $region28: #{tpu_custom_call.1} parent=23 // pred_fallthru
          _
        // Predicated region
        $region29: #{tpu_custom_call.1} parent=23 // pred_check
          %p197 = pneg %p71
        $region30: #{tpu_custom_call.1} parent=23 // pred_check_branch
          %199 = sbr.rel (%p197) target = $region32
        $region31: #{tpu_custom_call.1} parent=23 // pred_region
          %s200 = smul.u32 4, %s20
          %p201 = scmp.lt.s32.totalorder %s200, 31
          %s202 = scalar_select %p201, %s200, 31
          %s203 = smul.addr %s202, 8
          %s204 = scalar_lea.vmem %s1, %s203
          %s205 = smul.u32 4, %s20
        $region32: #{tpu_custom_call.1} parent=23 // pred_fallthru
          _
      $region24: #{tpu_custom_call.1} parent=5 // pred_fallthru
        _
      %p206 = scmp.le.s32.totalorder 1, %s13
      %p207 = scmp.lt.s32.totalorder %s13, 9
      %p208 = pnand %p206, %p207
      %p209 = pneg %p208
      // Predicated region
      $region33: #{tpu_custom_call.1} parent=5 // pred_check
        _
      $region34: #{tpu_custom_call.1} parent=5 // pred_check_branch
        %211 = sbr.rel (%p208) target = $region36
      $region35: #{tpu_custom_call.1} parent=5 // pred_region
        %s212 = ssub.s32 %s13, 1
        %s213 = smul.u32 4, %s22
        %p214 = scmp.lt.s32.totalorder %s213, 31
        %s215 = scalar_select %p214, %s213, 31
        %s216 = smul.addr %s215, 8
        %s217 = scalar_lea.vmem %s0, %s216
        %p218 = pneg %p51
        %p219 = pneg %p48
        %s220 = smul.u32 4, %s22
        %p221 = scmp.lt.s32.totalorder %s220, 31
        %s222 = scalar_select %p221, %s220, 31
        %s223 = smul.addr %s222, 8
        %s224 = scalar_lea.vmem %s1, %s223
        %p225 = pneg %p77
        %p226 = pneg %p74
        %p227 = scmp.lt.s32.totalorder %s23, 0
        %s228 = scalar_select %p227, %s23, 0
        %s229 = scalar_lea.vmem %s2, %s228
        %p230 = pneg %p103
        %p231 = pneg %p100
        %p232 = scmp.lt.s32.totalorder %s23, 0
        %s233 = scalar_select %p232, %s23, 0
        %s234 = scalar_lea.vmem %s3, %s233
        %p235 = pneg %p129
        %p236 = pneg %p126
        %p237 = pneg %p157
        %p238 = pneg %p154
        %s239 = sand.u32 %s144, 1
        %s240 = scalar_lea.sflag [#allocation3], %s239
        %s241 = sand.u32 %s144, 1
        %s242 = smul.addr %s241, 32
        %s243 = scalar_lea.vmem [#allocation2], %s242
        %s244 = smul.u32 4, %s22
        %p245 = scmp.lt.s32.totalorder %s244, 31
        %s246 = scalar_select %p245, %s244, 31
        %s247 = smul.addr %s246, 8
        %s248 = scalar_lea.vmem %s0, %s247
        %s249 = smul.u32 4, %s22
        %s250 = smul.u32 4, %s22
        %p251 = scmp.lt.s32.totalorder %s250, 31
        %s252 = scalar_select %p251, %s250, 31
        %s253 = smul.addr %s252, 8
        %s254 = scalar_lea.vmem %s1, %s253
        %s255 = smul.u32 4, %s22
        %p256 = scmp.lt.s32.totalorder %s23, 0
        %s257 = scalar_select %p256, %s23, 0
        %s258 = scalar_lea.vmem %s2, %s257
        %p259 = scmp.lt.s32.totalorder %s23, 0
        %s260 = scalar_select %p259, %s23, 0
        %s261 = scalar_lea.vmem %s3, %s260
        %s262 = smul.u32 4, %s22
        %v263 = vld [vmem:[%s248] sm:$0xff]
        %v264 = vld [vmem:[%s248 + $0x8] sm:$0xff]
        %v265 = vld [vmem:[%s248 + $0x10] sm:$0xff]
        %v266 = vld [vmem:[%s248 + $0x18] sm:$0xff]
        %v267 = vld [vmem:[%s258] sm:$0x1]
        %269 = vset.pattern.permute.xlu0 0
        %270 = vperm.xlu0 %269, %v263
        %v271 = vpop.permute.xlu0 %270
        %274 = vset.pattern.permute.xlu0 0
        %275 = vperm.xlu0 %274, %v264
        %v276 = vpop.permute.xlu0 %275
        %279 = vset.pattern.permute.xlu0 0
        %280 = vperm.xlu0 %279, %v265
        %v281 = vpop.permute.xlu0 %280
        %284 = vset.pattern.permute.xlu0 0
        %285 = vperm.xlu0 %284, %v266
        %v286 = vpop.permute.xlu0 %285
        %v289 = vlaneseq
        %v290 = vshrl.u32 %v289, 7
        %v291 = vsub.s32 0, %v290
        %v292 = vrot.slane %v267, %v291
        %v294 = vmul.f32 %v271, %v292
        %v295 = vmul.f32 %v276, %v292
        %v296 = vmul.f32 %v281, %v292
        %v297 = vmul.f32 %v286, %v292
        %v298 = vld [vmem:[%s261] sm:$0x1]
        %v300 = vlaneseq
        %v301 = vshrl.u32 %v300, 7
        %v302 = vsub.s32 0, %v301
        %v303 = vrot.slane %v298, %v302
        %v305 = vadd.f32 %v294, %v303
        %v306 = vadd.f32 %v295, %v303
        %v307 = vadd.f32 %v296, %v303
        %v308 = vadd.f32 %v297, %v303
        %v309 = vtanh.pop %v305
        %v310 = vtanh.pop %v306
        %v311 = vtanh.pop %v307
        %v312 = vtanh.pop %v308
        %v313 = vld [vmem:[%s254] sm:$0xff]
        %v314 = vld [vmem:[%s254 + $0x8] sm:$0xff]
        %v315 = vld [vmem:[%s254 + $0x10] sm:$0xff]
        %v316 = vld [vmem:[%s254 + $0x18] sm:$0xff]
        %318 = vset.pattern.permute.xlu0 0
        %319 = vperm.xlu0 %318, %v313
        %v320 = vpop.permute.xlu0 %319
        %323 = vset.pattern.permute.xlu0 0
        %324 = vperm.xlu0 %323, %v314
        %v325 = vpop.permute.xlu0 %324
        %328 = vset.pattern.permute.xlu0 0
        %329 = vperm.xlu0 %328, %v315
        %v330 = vpop.permute.xlu0 %329
        %333 = vset.pattern.permute.xlu0 0
        %334 = vperm.xlu0 %333, %v316
        %v335 = vpop.permute.xlu0 %334
        %v337 = vmul.f32 %v309, %v320
        %v338 = vmul.f32 %v310, %v325
        %v339 = vmul.f32 %v311, %v330
        %v340 = vmul.f32 %v312, %v335
        %341 = vst [vmem:[%s243] sm:$0xff] %v337
        %342 = vst [vmem:[%s243 + $0x8] sm:$0xff] %v338
        %343 = vst [vmem:[%s243 + $0x10] sm:$0xff] %v339
        %344 = vst [vmem:[%s243 + $0x18] sm:$0xff] %v340
        %s345 = sand.u32 %s144, 1
        %s346 = scalar_lea.sflag [#allocation3], %s345
        %s347 = sand.u32 %s144, 1
        %s348 = smul.addr %s347, 32
        %s349 = scalar_lea.vmem [#allocation2], %s348
        // Predicated region
        $region37: #{tpu_custom_call.1} parent=35 // pred_check
          %p350 = pneg %p154
        $region38: #{tpu_custom_call.1} parent=35 // pred_check_branch
          %352 = sbr.rel (%p350) target = $region40
        $region39: #{tpu_custom_call.1} parent=35 // pred_region
          %s353 = smul.u32 4, %s22
          %s355 = ssub.s32 512, 512
          %356 = vsyncadd %s346, %s355
          %s357 = sadd.s32 %s23, %s353
          %s358 = smul.addr %s357, 128
          %s359 = scalar_lea.hbm %s4, %s358
          %s360 = sshll.u32 %s349, 4
          %s361 = int_to_ptr.vmem [resolvable:$true] %s360
          %366 = dma.vmem_to_hbm [thread:$0]  %s361, 512, %s359, %s346, 128, 128, 8
        $region40: #{tpu_custom_call.1} parent=35 // pred_fallthru
          _
      $region36: #{tpu_custom_call.1} parent=5 // pred_fallthru
        _
      %p367 = scmp.le.s32.totalorder 2, %s13
      // Predicated region
      $region41: #{tpu_custom_call.1} parent=5 // pred_check
        %p368 = pneg %p367
      $region42: #{tpu_custom_call.1} parent=5 // pred_check_branch
        %370 = sbr.rel (%p368) target = $region44
      $region43: #{tpu_custom_call.1} parent=5 // pred_region
        %s371 = ssub.s32 %s13, 2
        // Predicated region
        $region45: #{tpu_custom_call.1} parent=43 // pred_check
          %p372 = pneg %p160
        $region46: #{tpu_custom_call.1} parent=43 // pred_check_branch
          %374 = sbr.rel (%p372) target = $region48
        $region47: #{tpu_custom_call.1} parent=43 // pred_region
          %s375 = sand.u32 %s145, 1
          %s376 = scalar_lea.sflag [#allocation3], %s375
          %s377 = sand.u32 %s145, 1
          %s378 = smul.addr %s377, 32
          %s379 = scalar_lea.vmem [#allocation2], %s378
          %380 = dma.done %s376, 512
        $region48: #{tpu_custom_call.1} parent=43 // pred_fallthru
          _
      $region44: #{tpu_custom_call.1} parent=5 // pred_fallthru
        _
    $region6: #{tpu_custom_call.1} parent=1 // loop_footer
      %s17 = sadd.s32 1, %s13
    $region7: #{tpu_custom_call.1} parent=1 // loop_footer_branch
      %12 = sbr.rel target = $region3
    $region8: #{tpu_custom_call.1} parent=1 // loop_exit
      _
    %381 = vsyncpa [#allocation3], 1
    %s382 = scalar_lea.sflag [#allocation3], 1
    %383 = vsyncpa %s382, 1

</llo_original>
